<compile_context>
chip_gen: v7x
topology: tpu7x:2x2x1
jax: 0.10.0
libtpu: 0.0.40
codegen_flags: <defaults>
</compile_context>

<pallas_src>
import math

import jax
import jax.numpy as jnp
from jax.experimental import pallas as pl
from jax.experimental.pallas import tpu as pltpu


# ----------------------------------------------------------------------------
# pe buffer construction (matches the PyTorch __init__ exactly)
# ----------------------------------------------------------------------------
def _make_pe(d_model: int, max_len: int, dtype=jnp.float32) -> jnp.ndarray:
    """Sinusoidal positional-encoding buffer, shape (1, max_len, d_model)."""
    position = jnp.arange(0, max_len, dtype=jnp.float32)[:, None]              # (max_len, 1)
    div_term = jnp.exp(
        jnp.arange(0, d_model, 2, dtype=jnp.float32)
        * (-jnp.log(jnp.float32(10000.0)) / d_model)
    )                                                                           # (d_model/2,)
    angles = position * div_term                                                # (max_len, d_model/2)
    pe = jnp.zeros((max_len, d_model), dtype=jnp.float32)
    pe = pe.at[:, 0::2].set(jnp.sin(angles))
    pe = pe.at[:, 1::2].set(jnp.cos(angles))
    return pe[None, :, :].astype(dtype)                                         # (1, max_len, d_model)


# ----------------------------------------------------------------------------
# kernel: one elementwise add on identically shaped (1, TR, L) VMEM tiles
# ----------------------------------------------------------------------------
def _add_pe_kernel(x_ref, pe_ref, o_ref):
    o_ref[...] = x_ref[...] + pe_ref[...]


# ----------------------------------------------------------------------------
# tiling plan
# ----------------------------------------------------------------------------
def _round_up(a: int, b: int) -> int:
    return (a + b - 1) // b * b


def _target_block_bytes() -> int:
    """Per-block byte target, gated per TPU generation (perf review items 3/4)."""
    try:
        kind = jax.devices()[0].device_kind.lower()
    except Exception:
        kind = ""
    if "v7" in kind:
        # 6 live blocks ~= 24 MiB < 32 MiB scoped default; amortizes per-step
        # overhead against v7x's ~3.2 TB/s HBM.
        return 4 * 1024 * 1024
    # v5e/v6e: 6 live blocks ~= 12 MiB, safe under v5e's 16 MiB scoped default.
    return 2 * 1024 * 1024


def _tile_rows(n_rows: int, n_lanes: int, itemsize: int, q_sub: int) -> int:
    """Rows per block: multiple of the sublane quantum, ~target block bytes."""
    target = _target_block_bytes()
    tr = max(q_sub, (target // (n_lanes * itemsize)) // q_sub * q_sub)
    # Never larger than one (sublane-rounded) block covering the whole extent.
    tr = min(tr, _round_up(n_rows, q_sub))
    return tr


# ----------------------------------------------------------------------------
# forward
# ----------------------------------------------------------------------------
def positional_encoding_forward(x: jnp.ndarray, pe: jnp.ndarray,
                                pe_flat: jnp.ndarray | None = None,
                                *, donate_x: bool = False) -> jnp.ndarray:
    """out = x + pe[:, :S].   x: (B, S, D); pe: (1, max_len, D)."""
    assert x.ndim == 3
    B, S, D = x.shape
    assert pe.ndim == 3 and pe.shape[0] == 1 and pe.shape[2] == D and pe.shape[1] >= S

    dtype = x.dtype
    itemsize = jnp.dtype(dtype).itemsize
    q_sub = max(8, 32 // itemsize)          # sublane quantum: 8 f32, 16 bf16, 32 int8

    dims = ("parallel", "parallel")

    # ---------------- D % 128 == 0: direct path, zero wrapper copies ----------
    if D % 128 == 0:
        if pe.dtype != dtype:
            # TODO(synk): build pe in the model dtype at init to avoid this per-call cast.
            pe = pe.astype(dtype)
        TR = _tile_rows(S, D, itemsize, q_sub)
        grid = (pl.cdiv(S, TR), B)          # pe block index is constant over inner (batch) axis
        cost = pl.CostEstimate(flops=B * S * D, transcendentals=0,
                               bytes_accessed=(2 * B + 1) * S * D * itemsize)
        return pl.pallas_call(
            _add_pe_kernel,
            out_shape=jax.ShapeDtypeStruct((B, S, D), dtype),
            grid_spec=pltpu.PrefetchScalarGridSpec(
                num_scalar_prefetch=0,
                grid=grid,
                in_specs=[
                    pl.BlockSpec((1, TR, D), lambda s, b: (b, s, 0)),   # x
                    pl.BlockSpec((1, TR, D), lambda s, b: (0, s, 0)),   # pe (batch-invariant)
                ],
                out_specs=pl.BlockSpec((1, TR, D), lambda s, b: (b, s, 0)),
            ),
            compiler_params=pltpu.CompilerParams(dimension_semantics=dims),
            cost_estimate=cost,
            # Aliasing only helps footprint (never bandwidth), and only when x
            # is the caller's real buffer -- which it is on this path.
            input_output_aliases=({0: 0} if donate_x else {}),
        )(x, pe)

    # ---------------- D % 128 != 0: lane-dense flattened path -----------------
    # Rows of 128 lanes -> unmasked vst.  Pad seq only to the 128-lane
    # quantum g (<= g-1 rows), never to a full tile; partial blocks handle the rest.
    g = 128 // math.gcd(D, 128)             # smallest row count whose D elems fill whole lanes

    if pe_flat is None:
        # TODO(synk): precompute pe_flat once at init (this re-flattens pe every call).
        ml = pe.shape[1]
        ml_pad = _round_up(ml, g)
        pe_p = pe if ml_pad == ml else jnp.pad(pe, ((0, 0), (0, ml_pad - ml), (0, 0)))
        pe_flat = pe_p.reshape(1, ml_pad * D // 128, 128)
    if pe_flat.dtype != dtype:
        pe_flat = pe_flat.astype(dtype)

    S_pad = _round_up(S, g)
    x_in = x if S_pad == S else jnp.pad(x, ((0, 0), (0, S_pad - S), (0, 0)))
    R = S_pad * D // 128
    x_in = x_in.reshape(B, R, 128)

    TR = _tile_rows(R, 128, itemsize, q_sub)
    grid = (pl.cdiv(R, TR), B)
    cost = pl.CostEstimate(flops=B * R * 128, transcendentals=0,
                           bytes_accessed=(2 * B + 1) * R * 128 * itemsize)
    out = pl.pallas_call(
        _add_pe_kernel,
        out_shape=jax.ShapeDtypeStruct((B, R, 128), dtype),
        grid_spec=pltpu.PrefetchScalarGridSpec(
            num_scalar_prefetch=0,
            grid=grid,
            in_specs=[
                pl.BlockSpec((1, TR, 128), lambda s, b: (b, s, 0)),   # x (flattened)
                pl.BlockSpec((1, TR, 128), lambda s, b: (0, s, 0)),   # pe (flattened, batch-invariant)
            ],
            out_specs=pl.BlockSpec((1, TR, 128), lambda s, b: (b, s, 0)),
        ),
        compiler_params=pltpu.CompilerParams(dimension_semantics=dims),
        cost_estimate=cost,
    )(x_in, pe_flat)

    out = out.reshape(B, S_pad, D)
    if S_pad != S:
        out = out[:, :S, :]
    return out


# ----------------------------------------------------------------------------
# module-like wrapper: all pe preprocessing happens once at "init"
# ----------------------------------------------------------------------------
class PositionalEncoding:
    """JAX/Pallas equivalent of the PyTorch PositionalEncoding module."""

    def __init__(self, d_model: int, max_len: int = 5000, dtype=jnp.float32):
        self.d_model = d_model
        self.max_len = max_len
        self.pe = _make_pe(d_model, max_len, dtype)                 # (1, max_len, d_model)
        if d_model % 128 != 0:
            g = 128 // math.gcd(d_model, 128)
            ml_pad = _round_up(max_len, g)
            pe_p = self.pe if ml_pad == max_len else jnp.pad(
                self.pe, ((0, 0), (0, ml_pad - max_len), (0, 0)))
            self.pe_flat = pe_p.reshape(1, ml_pad * d_model // 128, 128)
        else:
            self.pe_flat = None

    def __call__(self, x: jnp.ndarray) -> jnp.ndarray:
        return positional_encoding_forward(x, self.pe, self.pe_flat)


# ----------------------------------------------------------------------------
# self-test
# ----------------------------------------------------------------------------
if __name__ == "__main__":
    key = jax.random.PRNGKey(0)

    # Case 1: small d_model (< 128), S*D divisible by 128 -> flattened path, no pad.
    batch, seq, d_model, max_len = 2, 8, 32, 64
    x = jax.random.normal(key, (batch, seq, d_model), dtype=jnp.float32)
    mod = PositionalEncoding(d_model, max_len)
    ref = x + mod.pe[:, :seq]
    out = jax.block_until_ready(mod(x))
    assert out.shape == (batch, seq, d_model)
    assert jnp.allclose(out, ref, atol=1e-6), "mismatch vs reference (case 1)"

    # Case 2: d_model multiple of 128, seq NOT a multiple of the sublane quantum
    # -> direct path with a partial (masked) last block, zero wrapper copies.
    batch2, seq2, d_model2, max_len2 = 3, 20, 256, 48
    x2 = jax.random.normal(jax.random.PRNGKey(0), (batch2, seq2, d_model2), dtype=jnp.float32)
    mod2 = PositionalEncoding(d_model2, max_len2)
    ref2 = x2 + mod2.pe[:, :seq2]
    out2 = jax.block_until_ready(mod2(x2))
    assert out2.shape == (batch2, seq2, d_model2)
    assert jnp.allclose(out2, ref2, atol=1e-6), "mismatch vs reference (case 2)"

    # Case 3: d_model not dividing 128 and S*D not divisible by 128
    # -> flattened path with minimal pad-to-g and a partial last block.
    batch3, seq3, d_model3, max_len3 = 2, 7, 100, 40
    x3 = jax.random.normal(jax.random.PRNGKey(0), (batch3, seq3, d_model3), dtype=jnp.float32)
    mod3 = PositionalEncoding(d_model3, max_len3)
    ref3 = x3 + mod3.pe[:, :seq3]
    out3 = jax.block_until_ready(mod3(x3))
    assert out3.shape == (batch3, seq3, d_model3)
    assert jnp.allclose(out3, ref3, atol=1e-6), "mismatch vs reference (case 3)"

    print("KERNEL_OK")
</pallas_src>

<mosaic_0001>
module attributes {stable_mosaic.version = 11 : i64} {
  func.func @_add_pe_kernel(%arg0: i32, %arg1: i32, %arg2: memref<1x8x128xf32, #tpu.memory_space<vmem>>, %arg3: memref<1x8x128xf32, #tpu.memory_space<vmem>>, %arg4: memref<1x8x128xf32, #tpu.memory_space<vmem>>) attributes {dimension_semantics = [#tpu.dimension_semantics<parallel>, #tpu.dimension_semantics<parallel>], iteration_bounds = array<i64: 1, 2>, scalar_prefetch = 0 : i64, scratch_operands = 0 : i64, tpu.core_type = #tpu.core_type<tc>, window_params = [{transform_indices = @transform_0, window_bounds = array<i64: 1, 8, 128>}, {transform_indices = @transform_1, window_bounds = array<i64: 1, 8, 128>}, {transform_indices = @transform_2, window_bounds = array<i64: 1, 8, 128>}]} {
    %c0 = arith.constant 0 : index
    %c0_0 = arith.constant 0 : index
    %c0_1 = arith.constant 0 : index
    %0 = vector.load %arg2[%c0, %c0_0, %c0_1] : memref<1x8x128xf32, #tpu.memory_space<vmem>>, vector<1x8x128xf32>
    %c0_2 = arith.constant 0 : index
    %c0_3 = arith.constant 0 : index
    %c0_4 = arith.constant 0 : index
    %1 = vector.load %arg3[%c0_2, %c0_3, %c0_4] : memref<1x8x128xf32, #tpu.memory_space<vmem>>, vector<1x8x128xf32>
    %2 = arith.addf %0, %1 : vector<1x8x128xf32>
    %c0_5 = arith.constant 0 : index
    %c0_6 = arith.constant 0 : index
    %c0_7 = arith.constant 0 : index
    %3 = vector.load %arg4[%c0_5, %c0_6, %c0_7] : memref<1x8x128xf32, #tpu.memory_space<vmem>>, vector<1x8x128xf32>
    tpu.vector_store %arg4[%c0_5, %c0_6, %c0_7], %2 {strides = array<i32>} : memref<1x8x128xf32, #tpu.memory_space<vmem>>, vector<1x8x128xf32>,
    return
  }
  func.func @transform_0(%arg0: i32, %arg1: i32) -> (i32, i32, i32) {
    %c0_i32 = arith.constant 0 : i32
    %c0_i32_0 = arith.constant 0 : i32
    return %arg1, %arg0, %c0_i32 : i32, i32, i32
  }
  func.func @transform_1(%arg0: i32, %arg1: i32) -> (i32, i32, i32) {
    %c0_i32 = arith.constant 0 : i32
    %c0_i32_0 = arith.constant 0 : i32
    %c0_i32_1 = arith.constant 0 : i32
    return %c0_i32, %arg0, %c0_i32_0 : i32, i32, i32
  }
  func.func @transform_2(%arg0: i32, %arg1: i32) -> (i32, i32, i32) {
    %c0_i32 = arith.constant 0 : i32
    %c0_i32_0 = arith.constant 0 : i32
    return %arg1, %arg0, %c0_i32 : i32, i32, i32
  }
}

</mosaic_0001>

<llo_original>
// kernel: tpu_custom_call.1
$region0: #{tpu_custom_call.1}
  #allocation0 [shape = 'u32[]', space=smem, size = 0x4, offset = 0x4, fixed_abs, tag = 'smem constant byte address 0x4 - core index']
  #allocation1 [shape = 'u32[144,128]{1,0:T(1,128)}', space=vmem, size = 0x12000, scoped, tag = 'internal scratch']
  %s0 = inlined_call_operand.hbm [shape: f32[2,2,128], index: 0, kind: input, shape index: {}]
  %s1 = inlined_call_operand.hbm [shape: f32[1,16,128], index: 1, kind: input, shape index: {}]
  %s2 = inlined_call_operand.hbm [shape: f32[2,2,128], index: 2, kind: output, shape index: {}]
  %s3 = sld [smem:[#allocation0]]
  $region49: #{tpu_custom_call.1} parent=0
    _
  %s5 = ssub.s32 1, %s3
  %s6 = scalar_select 0, %s5, %s3
  $region1: #{tpu_custom_call.1} parent=0
    #allocation2 [shape = 'u8[8192]{0}', space=vmem, size = 0x2000, scoped, tag = 'input window, operand 0']
    #allocation3 [shape = 's32[2]{0}', space=sflag, size = 0x8, scoped, tag = 'scoped memory for tpu_custom_call.1']
    #allocation4 [shape = 's32[2]{0}', space=sflag, size = 0x8, scoped, tag = 'scoped memory for tpu_custom_call.1']
    #allocation5 [shape = 'u8[4096]{0}', space=vmem, size = 0x1000, scoped, tag = 'input window, operand 1, single buffered']
    #allocation6 [shape = 's32[1]{0}', space=sflag, size = 0x4, scoped, tag = 'scoped memory for tpu_custom_call.1']
    #allocation7 [shape = 'u8[8192]{0}', space=vmem, size = 0x2000, scoped, tag = 'output window, operand 0']
    %7 = vsyncpa [#allocation3], 0
    %s8 = scalar_lea.sflag [#allocation3], 1
    %9 = vsyncpa %s8, 0
    %10 = vsyncpa [#allocation6], 0
    %11 = vsyncpa [#allocation4], 0
    %s12 = scalar_lea.sflag [#allocation4], 1
    %13 = vsyncpa %s12, 0
    loop: start=0, step=1, limit=4
    $region2: #{tpu_custom_call.1} parent=1 // loop_pre_header
      _
    $region3: #{tpu_custom_call.1} parent=1 // loop_header
      %s15 = sphi 0, %s19
      %p16 = scmp.ge.s32.totalorder %s15, 4
      %s22 = sphi 0, %s34
      %s23 = sphi 0, %s30
      %s24 = sphi 0, %s22
      %s25 = sphi 0, %s23
      %s26 = sphi 0, %s24
      %s27 = sphi 0, %s25
      %s39 = sphi 0, %s41
      %s42 = sphi 0, %s39
      %s43 = sphi 0, %s42
      %s59 = sphi 0, %s43
      %s65 = sphi 0, %s67
      %s68 = sphi 0, %s65
      %s69 = sphi 0, %s68
      %s85 = sphi 0, %s69
      %s93 = sphi 0, %s95
      %s96 = sphi 0, %s93
      %s97 = sphi 0, %s96
      %s113 = sphi 0, %s97
    $region4: #{tpu_custom_call.1} parent=1 // loop_header_branch
      %18 = sbr.rel (%p16) target = $region8
    $region5: #{tpu_custom_call.1} parent=1 // loop_body
      %s20 = ssub.s32 %s15, 1
      %s21 = ssub.s32 %s15, 2
      %s28 = sadd.s32 1, %s23
      %p29 = scmp.ge.s32.totalorder %s28, 2
      %s30 = scalar_select %p29, 0, %s28
      %s31 = sadd.s32 1, %s22
      %s32 = scalar_select %p29, %s31, %s22
      %p33 = scmp.ge.s32.totalorder %s32, 1
      %s34 = scalar_select %p33, 0, %s32
      %s35 = ssub.s32 %s23, %s30
      %s36 = ssub.s32 %s22, %s34
      %s37 = sor.u32 %s35, %s36
      %p38 = scmp.eq.s32.totalorder %s37, 0
      %s40 = sadd.s32 %s39, 1
      %s41 = scalar_select %p38, %s39, %s40
      %p44 = pneg %p38
      %p45 = scmp.eq.s32.totalorder %s15, 1
      %p46 = por %p44, %p45
      %p47 = scmp.ne.s32.totalorder %s39, %s42
      %p48 = scmp.eq.s32.totalorder %s15, 0
      %p49 = por %p47, %p48
      %p50 = scmp.ne.s32.totalorder %s39, %s42
      %p51 = scmp.eq.s32.totalorder %s20, 1
      %p52 = por %p50, %p51
      %p53 = scmp.ne.s32.totalorder %s42, %s43
      %p54 = scmp.eq.s32.totalorder %s20, 0
      %p55 = por %p53, %p54
      %p56 = scmp.ne.s32.totalorder %s42, %s43
      %p57 = scmp.eq.s32.totalorder %s21, 1
      %p58 = por %p56, %p57
      %p60 = scmp.ne.s32.totalorder %s43, %s59
      %p61 = scmp.eq.s32.totalorder %s21, 0
      %p62 = por %p60, %p61
      %s63 = ssub.s32 %s22, %s34
      %p64 = scmp.eq.s32.totalorder %s63, 0
      %s66 = sadd.s32 %s65, 1
      %s67 = scalar_select %p64, %s65, %s66
      %p70 = pneg %p64
      %p71 = scmp.eq.s32.totalorder %s15, 1
      %p72 = por %p70, %p71
      %p73 = scmp.ne.s32.totalorder %s65, %s68
      %p74 = scmp.eq.s32.totalorder %s15, 0
      %p75 = por %p73, %p74
      %p76 = scmp.ne.s32.totalorder %s65, %s68
      %p77 = scmp.eq.s32.totalorder %s20, 1
      %p78 = por %p76, %p77
      %p79 = scmp.ne.s32.totalorder %s68, %s69
      %p80 = scmp.eq.s32.totalorder %s20, 0
      %p81 = por %p79, %p80
      %p82 = scmp.ne.s32.totalorder %s68, %s69
      %p83 = scmp.eq.s32.totalorder %s21, 1
      %p84 = por %p82, %p83
      %p86 = scmp.ne.s32.totalorder %s69, %s85
      %p87 = scmp.eq.s32.totalorder %s21, 0
      %p88 = por %p86, %p87
      %s89 = ssub.s32 %s23, %s30
      %s90 = ssub.s32 %s22, %s34
      %s91 = sor.u32 %s89, %s90
      %p92 = scmp.eq.s32.totalorder %s91, 0
      %s94 = sadd.s32 %s93, 1
      %s95 = scalar_select %p92, %s93, %s94
      %p98 = pneg %p92
      %p99 = scmp.eq.s32.totalorder %s15, 1
      %p100 = por %p98, %p99
      %p101 = scmp.ne.s32.totalorder %s93, %s96
      %p102 = scmp.eq.s32.totalorder %s15, 0
      %p103 = por %p101, %p102
      %p104 = scmp.ne.s32.totalorder %s93, %s96
      %p105 = scmp.eq.s32.totalorder %s20, 1
      %p106 = por %p104, %p105
      %p107 = scmp.ne.s32.totalorder %s96, %s97
      %p108 = scmp.eq.s32.totalorder %s20, 0
      %p109 = por %p107, %p108
      %p110 = scmp.ne.s32.totalorder %s96, %s97
      %p111 = scmp.eq.s32.totalorder %s21, 1
      %p112 = por %p110, %p111
      %p114 = scmp.ne.s32.totalorder %s97, %s113
      %p115 = scmp.eq.s32.totalorder %s21, 0
      %p116 = por %p114, %p115
      %p117 = scmp.le.s32.totalorder 1, %s15
      %p118 = scmp.lt.s32.totalorder %s15, 3
      %p119 = pnand %p117, %p118
      %p120 = pneg %p119
      // Predicated region
      $region9: #{tpu_custom_call.1} parent=5 // pred_check
        _
      $region10: #{tpu_custom_call.1} parent=5 // pred_check_branch
        %122 = sbr.rel (%p119) target = $region12
      $region11: #{tpu_custom_call.1} parent=5 // pred_region
        %s123 = ssub.s32 %s15, 1
        // Predicated region
        $region13: #{tpu_custom_call.1} parent=11 // pred_check
          %p124 = pneg %p81
        $region14: #{tpu_custom_call.1} parent=11 // pred_check_branch
          %126 = sbr.rel (%p124) target = $region16
        $region15: #{tpu_custom_call.1} parent=11 // pred_region
          %s128 = ssub.s32 128, 128
          %129 = vsyncadd [#allocation6], %s128
          %s130 = smul.addr %s24, 128
          %s131 = scalar_lea.hbm %s1, %s130
          %s133 = sshll.u32 [#allocation5], 4
          %s134 = int_to_ptr.vmem [resolvable:$true] %s133
          %136 = dma.hbm_to_vmem [thread:$0]  %s131, 128, %s134, [#allocation6]
        $region16: #{tpu_custom_call.1} parent=11 // pred_fallthru
          _
      $region12: #{tpu_custom_call.1} parent=5 // pred_fallthru
        _
      %p137 = scmp.lt.s32.totalorder %s15, 2
      // Predicated region
      $region17: #{tpu_custom_call.1} parent=5 // pred_check
        %p138 = pneg %p137
      $region18: #{tpu_custom_call.1} parent=5 // pred_check_branch
        %140 = sbr.rel (%p138) target = $region20
      $region19: #{tpu_custom_call.1} parent=5 // pred_region
        // Predicated region
        $region21: #{tpu_custom_call.1} parent=19 // pred_check
          %p141 = pneg %p49
        $region22: #{tpu_custom_call.1} parent=19 // pred_check_branch
          %143 = sbr.rel (%p141) target = $region24
        $region23: #{tpu_custom_call.1} parent=19 // pred_region
          %s144 = sand.u32 %s39, 1
          %s145 = scalar_lea.sflag [#allocation3], %s144
          %s146 = sand.u32 %s39, 1
          %s147 = smul.addr %s146, 8
          %s148 = scalar_lea.vmem [#allocation2], %s147
          %s149 = smul.u32 4, %s22
          %s150 = ssub.s32 1, %s149
          %s151 = smul.u32 32, %s150
          %s153 = ssub.s32 128, %s151
          %154 = vsyncadd %s145, %s153
          %p155 = scmp.ne.s32.totalorder 0, %s151
          %s156 = sadd.s32 %s149, %s23
          %s157 = smul.addr %s156, 32
          %s158 = scalar_lea.hbm %s0, %s157
          %s159 = smul.u32 2, %s150
          %s160 = sshll.u32 %s148, 4
          %s161 = int_to_ptr.vmem [resolvable:$true] %s160
          %s162 = sshll.u32 %s159, 4
          %166 = dma.hbm_to_vmem [thread:$0]  (%p155), %s158, %s162, %s161, %s145, 32, 32, 2
        $region24: #{tpu_custom_call.1} parent=19 // pred_fallthru
          _
      $region20: #{tpu_custom_call.1} parent=5 // pred_fallthru
        _
      %p167 = scmp.le.s32.totalorder 1, %s15
      %p168 = scmp.lt.s32.totalorder %s15, 3
      %p169 = pnand %p167, %p168
      %p170 = pneg %p169
      // Predicated region
      $region25: #{tpu_custom_call.1} parent=5 // pred_check
        _
      $region26: #{tpu_custom_call.1} parent=5 // pred_check_branch
        %172 = sbr.rel (%p169) target = $region28
      $region27: #{tpu_custom_call.1} parent=5 // pred_region
        %s173 = ssub.s32 %s15, 1
        %s174 = sand.u32 %s42, 1
        %s175 = scalar_lea.sflag [#allocation3], %s174
        %s176 = sand.u32 %s42, 1
        %s177 = smul.addr %s176, 8
        %s178 = scalar_lea.vmem [#allocation2], %s177
        // Predicated region
        $region29: #{tpu_custom_call.1} parent=27 // pred_check
          %p179 = pneg %p55
        $region30: #{tpu_custom_call.1} parent=27 // pred_check_branch
          %181 = sbr.rel (%p179) target = $region32
        $region31: #{tpu_custom_call.1} parent=27 // pred_region
          %182 = dma.done %s175, 128
        $region32: #{tpu_custom_call.1} parent=27 // pred_fallthru
          _
        // Predicated region
        $region33: #{tpu_custom_call.1} parent=27 // pred_check
          %p183 = pneg %p81
        $region34: #{tpu_custom_call.1} parent=27 // pred_check_branch
          %185 = sbr.rel (%p183) target = $region36
        $region35: #{tpu_custom_call.1} parent=27 // pred_region
          %186 = dma.done [#allocation6], 128
        $region36: #{tpu_custom_call.1} parent=27 // pred_fallthru
          _
        %s187 = sand.u32 %s42, 1
        %s188 = scalar_lea.sflag [#allocation3], %s187
        %s189 = sand.u32 %s42, 1
        %s190 = smul.addr %s189, 8
        %s191 = scalar_lea.vmem [#allocation2], %s190
        %p192 = pneg %p55
        %p193 = pneg %p52
        %p194 = pneg %p81
        %p195 = pneg %p78
        %p196 = pneg %p109
        %p197 = pneg %p106
        %s198 = sand.u32 %s96, 1
        %s199 = scalar_lea.sflag [#allocation4], %s198
        %s200 = sand.u32 %s96, 1
        %s201 = smul.addr %s200, 8
        %s202 = scalar_lea.vmem [#allocation7], %s201
        %s203 = smul.u32 4, %s24
        %s204 = ssub.s32 1, %s203
        %s205 = smul.u32 32, %s204
        %s206 = smul.u32 4, %s24
        %s207 = ssub.s32 1, %s206
        %s208 = smul.u32 32, %s207
        %v209 = vld [vmem:[%s178] sm:$0xff]
        %v210 = vld [vmem:[#allocation5] sm:$0xff]
        %v211 = vadd.f32 %v209, %v210
        %212 = vst [vmem:[%s202] sm:$0xff] %v211
        %s213 = sand.u32 %s96, 1
        %s214 = scalar_lea.sflag [#allocation4], %s213
        %s215 = sand.u32 %s96, 1
        %s216 = smul.addr %s215, 8
        %s217 = scalar_lea.vmem [#allocation7], %s216
        // Predicated region
        $region37: #{tpu_custom_call.1} parent=27 // pred_check
          %p218 = pneg %p106
        $region38: #{tpu_custom_call.1} parent=27 // pred_check_branch
          %220 = sbr.rel (%p218) target = $region40
        $region39: #{tpu_custom_call.1} parent=27 // pred_region
          %s221 = smul.u32 4, %s24
          %s222 = ssub.s32 1, %s221
          %s223 = smul.u32 32, %s222
          %s225 = ssub.s32 128, %s223
          %226 = vsyncadd %s214, %s225
          %p227 = scmp.ne.s32.totalorder 0, %s223
          %s228 = sadd.s32 %s221, %s25
          %s229 = smul.addr %s228, 32
          %s230 = scalar_lea.hbm %s2, %s229
          %s231 = smul.u32 2, %s222
          %s232 = sshll.u32 %s217, 4
          %s233 = int_to_ptr.vmem [resolvable:$true] %s232
          %s234 = sshll.u32 %s231, 4
          %238 = dma.vmem_to_hbm [thread:$0]  (%p227), %s233, %s234, %s230, %s214, 32, 32, 2
        $region40: #{tpu_custom_call.1} parent=27 // pred_fallthru
          _
      $region28: #{tpu_custom_call.1} parent=5 // pred_fallthru
        _
      %p239 = scmp.le.s32.totalorder 2, %s15
      // Predicated region
      $region41: #{tpu_custom_call.1} parent=5 // pred_check
        %p240 = pneg %p239
      $region42: #{tpu_custom_call.1} parent=5 // pred_check_branch
        %242 = sbr.rel (%p240) target = $region44
      $region43: #{tpu_custom_call.1} parent=5 // pred_region
        %s243 = ssub.s32 %s15, 2
        // Predicated region
        $region45: #{tpu_custom_call.1} parent=43 // pred_check
          %p244 = pneg %p112
        $region46: #{tpu_custom_call.1} parent=43 // pred_check_branch
          %246 = sbr.rel (%p244) target = $region48
        $region47: #{tpu_custom_call.1} parent=43 // pred_region
          %s247 = sand.u32 %s97, 1
          %s248 = scalar_lea.sflag [#allocation4], %s247
          %s249 = sand.u32 %s97, 1
          %s250 = smul.addr %s249, 8
          %s251 = scalar_lea.vmem [#allocation7], %s250
          %252 = dma.done %s248, 128
        $region48: #{tpu_custom_call.1} parent=43 // pred_fallthru
          _
      $region44: #{tpu_custom_call.1} parent=5 // pred_fallthru
        _
    $region6: #{tpu_custom_call.1} parent=1 // loop_footer
      %s19 = sadd.s32 1, %s15
    $region7: #{tpu_custom_call.1} parent=1 // loop_footer_branch
      %14 = sbr.rel target = $region3
    $region8: #{tpu_custom_call.1} parent=1 // loop_exit
      _
    %253 = vsyncpa [#allocation3], 1
    %s254 = scalar_lea.sflag [#allocation3], 1
    %255 = vsyncpa %s254, 1
    %256 = vsyncpa [#allocation6], 1
    %257 = vsyncpa [#allocation4], 1
    %s258 = scalar_lea.sflag [#allocation4], 1
    %259 = vsyncpa %s258, 1

</llo_original>
